<compile_context>
chip_gen: v7x
topology: tpu7x:2x2x1
jax: 0.10.0
libtpu: 0.0.40
codegen_flags: <defaults>
</compile_context>

<pallas_src>
import functools

import jax
import jax.numpy as jnp
from jax import lax
from jax.experimental import pallas as pl
from jax.experimental.pallas import tpu as pltpu

_BN_EPS = 1e-5
_LANE = 128
_SUBLANE = 8


def _round_up(x, m):
    return -(-x // m) * m


# --------------------------------------------------------------------------
# Pallas kernels
# --------------------------------------------------------------------------
def _stats_kernel(xs_ref, w_ref, s_ref, sq_ref):
    """Pass 1 (recompute structure): y = W @ xs, emit only partial BN stats."""
    y = jnp.dot(w_ref[...], xs_ref[...], preferred_element_type=jnp.float32)
    s_ref[...] = jnp.sum(y, axis=1, keepdims=True)
    sq_ref[...] = jnp.sum(y * y, axis=1, keepdims=True)


def _matmul_bn_relu_kernel(xs_ref, w_ref, scale_ref, shift_ref, o_ref):
    """Pass 2 (recompute structure): out = relu((W @ xs) * scale + shift)."""
    y = jnp.dot(w_ref[...], xs_ref[...], preferred_element_type=jnp.float32)
    o_ref[...] = jnp.maximum(y * scale_ref[...] + shift_ref[...], 0.0)


def _matmul_stats_kernel(xs_ref, w_ref, y_ref, s_ref, sq_ref):
    """Pass 1 (store-y fallback): y = W @ xs plus partial BN stats."""
    y = jnp.dot(w_ref[...], xs_ref[...], preferred_element_type=jnp.float32)
    y_ref[...] = y
    s_ref[...] = jnp.sum(y, axis=1, keepdims=True)
    sq_ref[...] = jnp.sum(y * y, axis=1, keepdims=True)


def _bn_relu_kernel(y_ref, scale_ref, shift_ref, o_ref):
    """Pass 2 (store-y fallback): out = relu(y * scale + shift), in place."""
    o_ref[...] = jnp.maximum(y_ref[...] * scale_ref[...] + shift_ref[...], 0.0)


# --------------------------------------------------------------------------
# VMEM budgeting / tile selection
# --------------------------------------------------------------------------
def _vmem_limit_bytes():
    """Generation-aware VMEM limit (~3/4 of physical, 16..100 MiB)."""
    phys = 64 * 1024 * 1024  # conservative fallback (v7x per-TC physical)
    try:
        info = pltpu.get_tpu_info()
        phys = int(getattr(info, "vmem_capacity_bytes", phys))
    except Exception:
        pass
    return int(max(min(phys * 3 // 4, 100 * 1024 * 1024), 16 * 1024 * 1024))


def _pick_tile(m, per_col_bytes, resident_bytes, vmem_limit, cap=2048):
    """Largest multiple-of-128 M tile fitting the VMEM budget (<= cap)."""
    budget = vmem_limit - resident_bytes - (2 << 20)  # 2 MiB slack
    tm = max(budget // max(per_col_bytes, 1), _LANE)
    tm = min(tm, cap, _round_up(m, _LANE))
    return int((tm // _LANE) * _LANE)


# --------------------------------------------------------------------------
# Fused conv-as-matmul + BatchNorm(batch stats) + ReLU driver
# --------------------------------------------------------------------------
def _matmul_bn_relu(xs, w, groups, compute_dtype=jnp.float32):
    """relu(batchnorm(w @ xs)) with per-channel batch statistics.

    xs: (Kc, M) f32, w: (R, Kc) f32 with R = groups * cout_p (R % 8 == 0).
    BN statistics for channel c pool all `groups` row-groups and all true M
    columns.  Returns (R, M) f32.
    """
    R, Kc = w.shape
    Kc2, M = xs.shape
    assert Kc == Kc2 and R % groups == 0 and R % _SUBLANE == 0
    coutp = R // groups

    kc_pad = _round_up(Kc, _SUBLANE)
    esz = jnp.dtype(compute_dtype).itemsize
    vmem_limit = _vmem_limit_bytes()

    # Budget: weights (counted twice in case the invariant block is still
    # double-buffered) + double-buffered xs tile + double-buffered out tile.
    resident = 2 * R * kc_pad * esz
    per_col = 2 * kc_pad * esz + 2 * R * 4
    tm = _pick_tile(M, per_col, resident, vmem_limit)
    Mp = _round_up(M, tm)
    nmt = Mp // tm

    if kc_pad != Kc or Mp != M:
        xs = jnp.pad(xs, ((0, kc_pad - Kc), (0, Mp - M)))
    if kc_pad != Kc:
        w = jnp.pad(w, ((0, 0), (0, kc_pad - Kc)))
    xs = xs.astype(compute_dtype)
    w = w.astype(compute_dtype)

    cparams = pltpu.CompilerParams(
        dimension_semantics=("parallel",),  # shards M tiles across v7x's 2 TCs
        vmem_limit_bytes=vmem_limit)

    xs_spec = pl.BlockSpec((kc_pad, tm), lambda m: (0, m))
    w_spec = pl.BlockSpec((R, kc_pad), lambda m: (0, 0))  # grid-invariant (1 DMA)
    stat_spec0 = pl.BlockSpec((R, 1), lambda m: (m, 0))
    stat_spec1 = pl.BlockSpec((R, 1), lambda m: (m, 0))

    mm_flops = int(2 * R * kc_pad * Mp)
    xs_bytes = int(kc_pad * Mp * esz + R * kc_pad * esz)

    # Recompute wins when reading xs twice is cheaper than a y write+read.
    recompute = (kc_pad * esz) < (2 * R * 4)

    # ---------------- Pass 1: matmul (+ optional y store) + partial stats ---
    if recompute:
        psum, psq = pl.pallas_call(
            _stats_kernel,
            out_shape=(jax.ShapeDtypeStruct((nmt * R, 1), jnp.float32),
                       jax.ShapeDtypeStruct((nmt * R, 1), jnp.float32)),
            grid_spec=pltpu.PrefetchScalarGridSpec(
                num_scalar_prefetch=0, grid=(nmt,),
                in_specs=[xs_spec, w_spec],
                out_specs=(stat_spec0, stat_spec1)),
            compiler_params=cparams,
            cost_estimate=pl.CostEstimate(
                flops=mm_flops + int(3 * R * Mp), transcendentals=0,
                bytes_accessed=xs_bytes + int(8 * nmt * R)),
        )(xs, w)
        y = None
    else:
        y, psum, psq = pl.pallas_call(
            _matmul_stats_kernel,
            out_shape=(jax.ShapeDtypeStruct((R, Mp), jnp.float32),
                       jax.ShapeDtypeStruct((nmt * R, 1), jnp.float32),
                       jax.ShapeDtypeStruct((nmt * R, 1), jnp.float32)),
            grid_spec=pltpu.PrefetchScalarGridSpec(
                num_scalar_prefetch=0, grid=(nmt,),
                in_specs=[xs_spec, w_spec],
                out_specs=(pl.BlockSpec((R, tm), lambda m: (0, m)),
                           stat_spec0, stat_spec1)),
            compiler_params=cparams,
            cost_estimate=pl.CostEstimate(
                flops=mm_flops + int(3 * R * Mp), transcendentals=0,
                bytes_accessed=xs_bytes + int(4 * R * Mp) + int(8 * nmt * R)),
        )(xs, w)

    # ---------------- Glue: fold partial sums -> per-channel scale / shift --
    row_sum = jnp.sum(psum.reshape(nmt, R), axis=0)            # (R,)
    row_sq = jnp.sum(psq.reshape(nmt, R), axis=0)              # (R,)
    ch_sum = jnp.sum(row_sum.reshape(groups, coutp), axis=0)   # (coutp,)
    ch_sq = jnp.sum(row_sq.reshape(groups, coutp), axis=0)
    count = float(groups * M)                                  # true columns only
    mean = ch_sum / count
    # NOTE: E[y^2]-E[y]^2 in f32 (clamped); acceptable at BN scales, see review.
    var = jnp.maximum(ch_sq / count - mean * mean, 0.0)
    scale_c = lax.rsqrt(var + _BN_EPS)
    shift_c = -mean * scale_c
    scale = jnp.tile(scale_c, groups).reshape(R, 1)
    shift = jnp.tile(shift_c, groups).reshape(R, 1)

    # ---------------- Pass 2: normalize + ReLU ------------------------------
    if recompute:
        out = pl.pallas_call(
            _matmul_bn_relu_kernel,
            out_shape=jax.ShapeDtypeStruct((R, Mp), jnp.float32),
            grid_spec=pltpu.PrefetchScalarGridSpec(
                num_scalar_prefetch=0, grid=(nmt,),
                in_specs=[xs_spec, w_spec,
                          pl.BlockSpec((R, 1), lambda m: (0, 0)),
                          pl.BlockSpec((R, 1), lambda m: (0, 0))],
                out_specs=pl.BlockSpec((R, tm), lambda m: (0, m))),
            compiler_params=cparams,
            cost_estimate=pl.CostEstimate(
                flops=mm_flops + int(3 * R * Mp), transcendentals=0,
                bytes_accessed=xs_bytes + int(4 * R * Mp) + int(8 * R)),
        )(xs, w, scale, shift)
    else:
        # Pure streaming VPU pass: use a bigger tile (only y-in/out + 2 vectors
        # live per step) and alias the output in place on the conv output.
        per_col2 = 4 * R * 4
        budget2 = vmem_limit - (4 << 20)
        k = 1
        while (k * 2 <= nmt and nmt % (k * 2) == 0
               and tm * k * 2 * per_col2 <= budget2 and tm * k * 2 <= 8192):
            k *= 2
        tm2 = tm * k
        nmt2 = Mp // tm2
        out = pl.pallas_call(
            _bn_relu_kernel,
            out_shape=jax.ShapeDtypeStruct((R, Mp), jnp.float32),
            grid_spec=pltpu.PrefetchScalarGridSpec(
                num_scalar_prefetch=0, grid=(nmt2,),
                in_specs=[pl.BlockSpec((R, tm2), lambda m: (0, m)),
                          pl.BlockSpec((R, 1), lambda m: (0, 0)),
                          pl.BlockSpec((R, 1), lambda m: (0, 0))],
                out_specs=pl.BlockSpec((R, tm2), lambda m: (0, m))),
            input_output_aliases={0: 0},
            compiler_params=cparams,
            cost_estimate=pl.CostEstimate(
                flops=int(2 * R * Mp), transcendentals=0,
                bytes_accessed=int(8 * R * Mp)),
        )(y, scale, shift)

    return out[:, :M] if Mp != M else out


# --------------------------------------------------------------------------
# Layout glue: express ConvTranspose2d as a single matmul
# --------------------------------------------------------------------------
def _parity_shifts(kernel, padding):
    """Input row shifts needed by the sub-pixel decomposition along one axis."""
    return sorted({(padding + par - k) // 2
                   for par in (0, 1) for k in range(kernel)
                   if (padding + par - k) % 2 == 0})


def _build_subpixel(x_nchw, weight, padding, cout_p):
    """stride=2 ConvTranspose2d cropped to 2H x 2W as ONE matmul
    (4*cout_p, nv*Cin) @ (nv*Cin, N*H*W) over shifted views of the UNdilated
    input.  Output row block p = 2*pa + pb holds pixels (2a+pa, 2b+pb).
    Works for any padding / output_padding (they only shift which full-conv
    pixels survive the crop)."""
    N, Cin, H, W = x_nchw.shape
    _, Cout, KH, KW = weight.shape
    M = N * H * W

    sh, sw = _parity_shifts(KH, padding), _parity_shifts(KW, padding)
    nvh, nvw = len(sh), len(sw)

    # Single layout change (NCHW -> CNHW); views are plain shifted slices.
    xc = jnp.transpose(x_nchw, (1, 0, 2, 3))                     # (Cin,N,H,W)
    pb_h, pa_h = max(0, -min(sh)), max(0, max(sh))
    pb_w, pa_w = max(0, -min(sw)), max(0, max(sw))
    xp = jnp.pad(xc, ((0, 0), (0, 0), (pb_h, pa_h), (pb_w, pa_w)))
    views = []
    for s_h in sh:
        for s_w in sw:
            views.append(xp[:, :, pb_h + s_h:pb_h + s_h + H,
                            pb_w + s_w:pb_w + s_w + W])          # = x[a+s_h, b+s_w]
    xs = jnp.stack(views, axis=0).reshape(nvh * nvw * Cin, M)    # (nv*Cin, M)

    # out[2a+pa, 2b+pb] += x[a + (p+pa-kh)/2, b + (p+pb-kw)/2] * w[:, :, kh, kw]
    wall = jnp.zeros((4 * cout_p, nvh * nvw * Cin), weight.dtype)
    for pa in range(2):
        for pb in range(2):
            p = 2 * pa + pb
            for kh in range(KH):
                if (padding + pa - kh) % 2:
                    continue
                vh = sh.index((padding + pa - kh) // 2)
                for kw in range(KW):
                    if (padding + pb - kw) % 2:
                        continue
                    vw = sw.index((padding + pb - kw) // 2)
                    v = vh * nvw + vw
                    wall = wall.at[p * cout_p:p * cout_p + Cout,
                                   v * Cin:(v + 1) * Cin].set(weight[:, :, kh, kw].T)
    return xs, wall


def _build_stride1(x_nchw, weight, padding, cout_p):
    """stride=1 ConvTranspose2d = full-correlation conv with flipped kernel;
    all KH*KW taps folded into one contraction."""
    N, Cin, H, W = x_nchw.shape
    _, Cout, KH, KW = weight.shape
    ph, pw = KH - 1 - padding, KW - 1 - padding
    assert ph >= 0 and pw >= 0  # TODO(synk): padding >= kernel_size needs a crop path
    oh, ow = H + KH - 1 - 2 * padding, W + KW - 1 - 2 * padding
    assert oh > 0 and ow > 0
    M = N * oh * ow

    xc = jnp.transpose(x_nchw, (1, 0, 2, 3))                     # (Cin,N,H,W)
    xp = jnp.pad(xc, ((0, 0), (0, 0), (ph, ph), (pw, pw)))
    taps = [xp[:, :, kh:kh + oh, kw:kw + ow]
            for kh in range(KH) for kw in range(KW)]             # (Cin,N,oh,ow)
    xs = jnp.stack(taps, axis=0).reshape(KH * KW * Cin, M)

    wk = jnp.flip(weight, axis=(2, 3))                           # (Cin,Cout,KH,KW)
    wk = jnp.transpose(wk, (1, 2, 3, 0)).reshape(Cout, KH * KW * Cin)
    w = jnp.zeros((cout_p, KH * KW * Cin), weight.dtype).at[:Cout].set(wk)
    return xs, w, oh, ow


# --------------------------------------------------------------------------
# Public forward
# --------------------------------------------------------------------------
def deconv2d_forward(x_nchw, weight, *, stride=2, padding=0, output_padding=0,
                     compute_dtype=jnp.float32):
    """Deconv2d.forward (ConvTranspose2d(bias=False) -> crop -> BN -> ReLU).

    x_nchw: (N, Cin, H, W) f32
    weight: (Cin, Cout, KH, KW) f32 (PyTorch ConvTranspose2d layout)
    compute_dtype: jnp.float32 (default, exact) or jnp.bfloat16 (faster MXU /
                   half the xs DMA bytes on v6e/v7x, f32 accumulation).
    """
    N, Cin, H, W = x_nchw.shape
    wcin, Cout, KH, KW = weight.shape
    assert wcin == Cin
    assert stride in (1, 2)

    if stride == 2:
        # Module crops to exactly 2H x 2W; require the conv output to be that big.
        assert KH + output_padding - 2 * padding >= 2, "conv output smaller than 2H"
        assert KW + output_padding - 2 * padding >= 2, "conv output smaller than 2W"
        cout_p = _round_up(Cout, 2)                              # 4*cout_p % 8 == 0
        xs, wmat = _build_subpixel(x_nchw, weight, padding, cout_p)
        out = _matmul_bn_relu(xs, wmat, groups=4,
                              compute_dtype=compute_dtype)       # (4*cout_p, N*H*W)
        y4 = out.reshape(2, 2, cout_p, N, H, W)[:, :, :Cout]     # (pa,pb,o,n,a,b)
        # TODO(synk): fold this parity interleave into the pass-2 store.
        y4 = jnp.transpose(y4, (3, 2, 4, 0, 5, 1))               # (n,o,a,pa,b,pb)
        return y4.reshape(N, Cout, 2 * H, 2 * W)

    cout_p = _round_up(Cout, _SUBLANE)
    xs, wmat, oh, ow = _build_stride1(x_nchw, weight, padding, cout_p)
    out = _matmul_bn_relu(xs, wmat, groups=1,
                          compute_dtype=compute_dtype)           # (cout_p, N*oh*ow)
    out = out[:Cout].reshape(Cout, N, oh, ow)
    return jnp.transpose(out, (1, 0, 2, 3))


# --------------------------------------------------------------------------
# Pure-JAX/XLA reference of the same forward pass (for self-check)
# --------------------------------------------------------------------------
def _reference(x_nchw, weight, *, stride=2, padding=0):
    N, Cin, H, W = x_nchw.shape
    _, Cout, KH, KW = weight.shape
    k_oihw = jnp.transpose(jnp.flip(weight, axis=(2, 3)), (1, 0, 2, 3))
    y_full = lax.conv_general_dilated(
        x_nchw, k_oihw, window_strides=(1, 1),
        padding=[(KH - 1, KH - 1), (KW - 1, KW - 1)],
        lhs_dilation=(stride, stride),
        dimension_numbers=('NCHW', 'OIHW', 'NCHW'))
    if stride == 2:
        y = y_full[:, :, padding:padding + 2 * H, padding:padding + 2 * W]
    else:
        hf, wf = y_full.shape[2], y_full.shape[3]
        y = y_full[:, :, padding:hf - padding, padding:wf - padding]
    mean = jnp.mean(y, axis=(0, 2, 3), keepdims=True)
    var = jnp.mean((y - mean) ** 2, axis=(0, 2, 3), keepdims=True)
    return jnp.maximum((y - mean) * lax.rsqrt(var + _BN_EPS), 0.0)


if __name__ == "__main__":
    key = jax.random.PRNGKey(0)
    kx, kw = jax.random.split(key)

    # Deconv2d(in_channels=4, out_channels=8, kernel_size=3, stride=2,
    #          relu=True, bn=True) -> ConvTranspose2d has no bias.
    N, Cin, Cout, H, W, K = 2, 4, 8, 16, 16, 3

    x = jax.random.normal(kx, (N, Cin, H, W), dtype=jnp.float32)

    # Deterministic xavier-uniform-style init for the ConvTranspose2d weight
    # (shape (in, out, kh, kw)); values need not match torch's RNG.
    fan_in, fan_out = Cout * K * K, Cin * K * K
    bound = (6.0 / (fan_in + fan_out)) ** 0.5
    weight = jax.random.uniform(kw, (Cin, Cout, K, K), jnp.float32,
                                minval=-bound, maxval=bound)

    def _check(out, ref, name):
        if out.shape != ref.shape:
            raise AssertionError(f"{name}: shape {out.shape} != {ref.shape}")
        if not jnp.allclose(out, ref, atol=1e-4, rtol=1e-4):
            raise AssertionError(
                f"{name}: max abs diff = {float(jnp.max(jnp.abs(out - ref)))}")

    # stride=2, padding=0 (sub-pixel path, recompute structure).
    fwd2 = jax.jit(functools.partial(deconv2d_forward, stride=2, padding=0))
    out2 = jax.block_until_ready(fwd2(x, weight))
    assert out2.shape == (N, Cout, 2 * H, 2 * W), out2.shape
    _check(out2, _reference(x, weight, stride=2, padding=0), "stride=2 padding=0")

    # stride=2, padding=1, output_padding=1 (generalized sub-pixel path).
    fwd2p = jax.jit(functools.partial(deconv2d_forward, stride=2, padding=1,
                                      output_padding=1))
    out2p = jax.block_until_ready(fwd2p(x, weight))
    _check(out2p, _reference(x, weight, stride=2, padding=1),
           "stride=2 padding=1")

    # stride=1 path (folded-tap conv, store-y fallback structure).
    fwd1 = jax.jit(functools.partial(deconv2d_forward, stride=1, padding=0))
    out1 = jax.block_until_ready(fwd1(x, weight))
    assert out1.shape == (N, Cout, H + K - 1, W + K - 1), out1.shape
    _check(out1, _reference(x, weight, stride=1, padding=0), "stride=1")

    print("KERNEL_OK")
</pallas_src>

<mosaic_0001>
module attributes {stable_mosaic.version = 11 : i64} {
  func.func @_stats_kernel(%arg0: i32, %arg1: memref<16x512xf32, #tpu.memory_space<vmem>>, %arg2: memref<32x16xf32, #tpu.memory_space<vmem>>, %arg3: memref<32x1xf32, #tpu.memory_space<vmem>>, %arg4: memref<32x1xf32, #tpu.memory_space<vmem>>) attributes {dimension_semantics = [#tpu.dimension_semantics<parallel>], iteration_bounds = array<i64: 1>, scalar_prefetch = 0 : i64, scratch_operands = 0 : i64, tpu.core_type = #tpu.core_type<tc>, window_params = [{transform_indices = @transform_0, window_bounds = array<i64: 16, 512>}, {pipeline_mode = #tpu.pipeline_mode<synchronous>, transform_indices = @transform_1, window_bounds = array<i64: 32, 16>}, {transform_indices = @transform_2, window_bounds = array<i64: 32, 1>}, {transform_indices = @transform_3, window_bounds = array<i64: 32, 1>}]} {
    %c0 = arith.constant 0 : index
    %c0_0 = arith.constant 0 : index
    %0 = vector.load %arg2[%c0, %c0_0] : memref<32x16xf32, #tpu.memory_space<vmem>>, vector<32x16xf32>
    %c0_1 = arith.constant 0 : index
    %c0_2 = arith.constant 0 : index
    %1 = vector.load %arg1[%c0_1, %c0_2] : memref<16x512xf32, #tpu.memory_space<vmem>>, vector<16x512xf32>
    %cst = arith.constant dense<0.000000e+00> : vector<32x512xf32>
    %2 = tpu.matmul %0, %1, %cst {dimension_numbers = #tpu.dot_dimension_numbers<[1], [0], [0], [1], [0, 0, 1, 1], [], []>} : vector<32x16xf32>, vector<16x512xf32>, vector<32x512xf32> -> vector<32x512xf32>
    %cst_3 = arith.constant dense<0.000000e+00> : vector<32xf32>
    %3 = vector.multi_reduction <add>, %2, %cst_3 [1] : vector<32x512xf32> to vector<32xf32>
    %4 = vector.shape_cast %3 : vector<32xf32> to vector<32x1xf32>
    %c0_4 = arith.constant 0 : index
    %c0_5 = arith.constant 0 : index
    %5 = vector.load %arg3[%c0_4, %c0_5] : memref<32x1xf32, #tpu.memory_space<vmem>>, vector<32x1xf32>
    tpu.vector_store %arg3[%c0_4, %c0_5], %4 {strides = array<i32>} : memref<32x1xf32, #tpu.memory_space<vmem>>, vector<32x1xf32>,
    %6 = arith.mulf %2, %2 : vector<32x512xf32>
    %cst_6 = arith.constant dense<0.000000e+00> : vector<32xf32>
    %7 = vector.multi_reduction <add>, %6, %cst_6 [1] : vector<32x512xf32> to vector<32xf32>
    %8 = vector.shape_cast %7 : vector<32xf32> to vector<32x1xf32>
    %c0_7 = arith.constant 0 : index
    %c0_8 = arith.constant 0 : index
    %9 = vector.load %arg4[%c0_7, %c0_8] : memref<32x1xf32, #tpu.memory_space<vmem>>, vector<32x1xf32>
    tpu.vector_store %arg4[%c0_7, %c0_8], %8 {strides = array<i32>} : memref<32x1xf32, #tpu.memory_space<vmem>>, vector<32x1xf32>,
    return
  }
  func.func @transform_0(%arg0: i32) -> (i32, i32) {
    %c0_i32 = arith.constant 0 : i32
    %c0_i32_0 = arith.constant 0 : i32
    return %c0_i32, %arg0 : i32, i32
  }
  func.func @transform_1(%arg0: i32) -> (i32, i32) {
    %c0_i32 = arith.constant 0 : i32
    %c0_i32_0 = arith.constant 0 : i32
    %c0_i32_1 = arith.constant 0 : i32
    return %c0_i32, %c0_i32_0 : i32, i32
  }
  func.func @transform_2(%arg0: i32) -> (i32, i32) {
    %c0_i32 = arith.constant 0 : i32
    %c0_i32_0 = arith.constant 0 : i32
    return %arg0, %c0_i32 : i32, i32
  }
  func.func @transform_3(%arg0: i32) -> (i32, i32) {
    %c0_i32 = arith.constant 0 : i32
    %c0_i32_0 = arith.constant 0 : i32
    return %arg0, %c0_i32 : i32, i32
  }
}

module attributes {stable_mosaic.version = 11 : i64} {
  func.func @_matmul_bn_relu_kernel(%arg0: i32, %arg1: memref<16x512xf32, #tpu.memory_space<vmem>>, %arg2: memref<32x16xf32, #tpu.memory_space<vmem>>, %arg3: memref<32x1xf32, #tpu.memory_space<vmem>>, %arg4: memref<32x1xf32, #tpu.memory_space<vmem>>, %arg5: memref<32x512xf32, #tpu.memory_space<vmem>>) attributes {dimension_semantics = [#tpu.dimension_semantics<parallel>], iteration_bounds = array<i64: 1>, scalar_prefetch = 0 : i64, scratch_operands = 0 : i64, tpu.core_type = #tpu.core_type<tc>, window_params = [{transform_indices = @transform_0, window_bounds = array<i64: 16, 512>}, {pipeline_mode = #tpu.pipeline_mode<synchronous>, transform_indices = @transform_1, window_bounds = array<i64: 32, 16>}, {pipeline_mode = #tpu.pipeline_mode<synchronous>, transform_indices = @transform_2, window_bounds = array<i64: 32, 1>}, {pipeline_mode = #tpu.pipeline_mode<synchronous>, transform_indices = @transform_3, window_bounds = array<i64: 32, 1>}, {transform_indices = @transform_4, window_bounds = array<i64: 32, 512>}]} {
    %c0 = arith.constant 0 : index
    %c0_0 = arith.constant 0 : index
    %0 = vector.load %arg2[%c0, %c0_0] : memref<32x16xf32, #tpu.memory_space<vmem>>, vector<32x16xf32>
    %c0_1 = arith.constant 0 : index
    %c0_2 = arith.constant 0 : index
    %1 = vector.load %arg1[%c0_1, %c0_2] : memref<16x512xf32, #tpu.memory_space<vmem>>, vector<16x512xf32>
    %cst = arith.constant dense<0.000000e+00> : vector<32x512xf32>
    %2 = tpu.matmul %0, %1, %cst {dimension_numbers = #tpu.dot_dimension_numbers<[1], [0], [0], [1], [0, 0, 1, 1], [], []>} : vector<32x16xf32>, vector<16x512xf32>, vector<32x512xf32> -> vector<32x512xf32>
    %c0_3 = arith.constant 0 : index
    %c0_4 = arith.constant 0 : index
    %3 = vector.load %arg3[%c0_3, %c0_4] : memref<32x1xf32, #tpu.memory_space<vmem>>, vector<32x1xf32>
    %4 = vector.broadcast %3 : vector<32x1xf32> to vector<32x512xf32>
    %5 = arith.mulf %2, %4 : vector<32x512xf32>
    %c0_5 = arith.constant 0 : index
    %c0_6 = arith.constant 0 : index
    %6 = vector.load %arg4[%c0_5, %c0_6] : memref<32x1xf32, #tpu.memory_space<vmem>>, vector<32x1xf32>
    %7 = vector.broadcast %6 : vector<32x1xf32> to vector<32x512xf32>
    %8 = arith.addf %5, %7 : vector<32x512xf32>
    %cst_7 = arith.constant 0.000000e+00 : f32
    %9 = vector.broadcast %cst_7 : f32 to vector<32x512xf32>
    %10 = arith.maximumf %8, %9 : vector<32x512xf32>
    %c0_8 = arith.constant 0 : index
    %c0_9 = arith.constant 0 : index
    %11 = vector.load %arg5[%c0_8, %c0_9] : memref<32x512xf32, #tpu.memory_space<vmem>>, vector<32x512xf32>
    tpu.vector_store %arg5[%c0_8, %c0_9], %10 {strides = array<i32>} : memref<32x512xf32, #tpu.memory_space<vmem>>, vector<32x512xf32>,
    return
  }
  func.func @transform_0(%arg0: i32) -> (i32, i32) {
    %c0_i32 = arith.constant 0 : i32
    %c0_i32_0 = arith.constant 0 : i32
    return %c0_i32, %arg0 : i32, i32
  }
  func.func @transform_1(%arg0: i32) -> (i32, i32) {
    %c0_i32 = arith.constant 0 : i32
    %c0_i32_0 = arith.constant 0 : i32
    %c0_i32_1 = arith.constant 0 : i32
    return %c0_i32, %c0_i32_0 : i32, i32
  }
  func.func @transform_2(%arg0: i32) -> (i32, i32) {
    %c0_i32 = arith.constant 0 : i32
    %c0_i32_0 = arith.constant 0 : i32
    %c0_i32_1 = arith.constant 0 : i32
    return %c0_i32, %c0_i32_0 : i32, i32
  }
  func.func @transform_3(%arg0: i32) -> (i32, i32) {
    %c0_i32 = arith.constant 0 : i32
    %c0_i32_0 = arith.constant 0 : i32
    %c0_i32_1 = arith.constant 0 : i32
    return %c0_i32, %c0_i32_0 : i32, i32
  }
  func.func @transform_4(%arg0: i32) -> (i32, i32) {
    %c0_i32 = arith.constant 0 : i32
    %c0_i32_0 = arith.constant 0 : i32
    return %c0_i32, %arg0 : i32, i32
  }
}

</mosaic_0001>

<llo_original>
// kernel: tile.18
$region0: #{tile.18}
  #allocation0 [shape = 's32[1]{0}', space=sflag, size = 0x4, scoped, tag = 'scoped memory for tile.18']
  %s0 = inlined_call_operand.vmem [shape: f32[8], index: 0, kind: input, shape index: {}]
  %s1 = inlined_call_operand.vmem [shape: f32[4,8], index: 1, kind: output, shape index: {}]
  // Predicated region
  $region2: #{tile.18} parent=0 // pred_check
    _
  $region3: #{tile.18} parent=0 // pred_check_branch
    %3 = sbr.rel (0) target = $region5
  $region4: #{tile.18} parent=0 // pred_region
    _
  $region5: #{tile.18} parent=0 // pred_fallthru
    _
  %v4 = vld [vmem:[%s0] ss:$0 sm:$0xff]
  %5 = vst [vmem:[%s1] sm:$0xf] %v4

// kernel: tile.0
$region0: #{tile.0}
  %s0 = inlined_call_operand.vmem [shape: f32[4,8], index: 0, kind: input, shape index: {}]
  %s1 = inlined_call_operand.vmem [shape: f32[32,1], index: 1, kind: output, shape index: {}]
  $region1: #{tile.0} parent=0
    #allocation0 [shape = 'u8[4096]{0}', space=vmem, size = 0x1000, scoped, tag = 'scoped mem for input reshape']
    %s3 = sshllo.u32 0, 4
    %v4 = vld [vmem:[%s0] sm:%s3]
    %5 = vst [vmem:[#allocation0] sm:%s3] %v4
    %v6 = vld [vmem:[#allocation0] sm:$0xf]
    %vm7 = vcmask 7168
    %8 = vst.msk [vmem:[%s1] ss:$8 sm:$0xf] %vm7, %v6
    %v9 = vld [vmem:[#allocation0] sm:$0xf]
    %10 = vrot.lane.b32.xlu0 %v9, 127
    %v11 = vpop.permute.xlu0 %10
    %vm12 = vcmask 7168
    %s13 = scalar_lea.vmem %s1, 1
    %14 = vst.msk [vmem:[%s13] ss:$8 sm:$0xf] %vm12, %v11
    %v15 = vld [vmem:[#allocation0] sm:$0xf]
    %16 = vrot.lane.b32.xlu0 %v15, 126
    %v17 = vpop.permute.xlu0 %16
    %vm18 = vcmask 7168
    %s19 = scalar_lea.vmem %s1, 2
    %20 = vst.msk [vmem:[%s19] ss:$8 sm:$0xf] %vm18, %v17
    %v21 = vld [vmem:[#allocation0] sm:$0xf]
    %22 = vrot.lane.b32.xlu0 %v21, 125
    %v23 = vpop.permute.xlu0 %22
    %vm24 = vcmask 7168
    %s25 = scalar_lea.vmem %s1, 3
    %26 = vst.msk [vmem:[%s25] ss:$8 sm:$0xf] %vm24, %v23
    %v27 = vld [vmem:[#allocation0] sm:$0xf]
    %28 = vrot.lane.b32.xlu0 %v27, 124
    %v29 = vpop.permute.xlu0 %28
    %vm30 = vcmask 7168
    %s31 = scalar_lea.vmem %s1, 4
    %32 = vst.msk [vmem:[%s31] ss:$8 sm:$0xf] %vm30, %v29
    %v33 = vld [vmem:[#allocation0] sm:$0xf]
    %34 = vrot.lane.b32.xlu0 %v33, 123
    %v35 = vpop.permute.xlu0 %34
    %vm36 = vcmask 7168
    %s37 = scalar_lea.vmem %s1, 5
    %38 = vst.msk [vmem:[%s37] ss:$8 sm:$0xf] %vm36, %v35
    %v39 = vld [vmem:[#allocation0] sm:$0xf]
    %40 = vrot.lane.b32.xlu0 %v39, 122
    %v41 = vpop.permute.xlu0 %40
    %vm42 = vcmask 7168
    %s43 = scalar_lea.vmem %s1, 6
    %44 = vst.msk [vmem:[%s43] ss:$8 sm:$0xf] %vm42, %v41
    %v45 = vld [vmem:[#allocation0] sm:$0xf]
    %46 = vrot.lane.b32.xlu0 %v45, 121
    %v47 = vpop.permute.xlu0 %46
    %vm48 = vcmask 7168
    %s49 = scalar_lea.vmem %s1, 7
    %50 = vst.msk [vmem:[%s49] ss:$8 sm:$0xf] %vm48, %v47

// kernel: deconv2d_forward.3
$region0: #{deconv2d_forward.3}
  #allocation0 [shape = 'u32[]', space=smem, size = 0x4, offset = 0x4, fixed_abs, tag = 'smem constant byte address 0x4 - core index']
  #allocation1 [shape = 'u32[144,128]{1,0:T(1,128)}', space=vmem, size = 0x12000, scoped, tag = 'internal scratch']
  %s0 = inlined_call_operand.vmem [shape: f32[16,512], index: 0, kind: input, shape index: {}]
  %s1 = inlined_call_operand.vmem [shape: f32[32,16], index: 1, kind: input, shape index: {}]
  %s2 = inlined_call_operand.vmem [shape: f32[32,1], index: 2, kind: input, shape index: {}]
  %s3 = inlined_call_operand.vmem [shape: f32[32,1], index: 3, kind: input, shape index: {}]
  %s4 = inlined_call_operand.vmem [shape: f32[32,512], index: 4, kind: output, shape index: {}]
  %s5 = sld [smem:[#allocation0]]
  $region26: #{deconv2d_forward.3} parent=0
    _
  %s7 = ssub.s32 1, %s5
  %s8 = scalar_select 0, %s7, %s5
  // Predicated region
  $region2: #{deconv2d_forward.3} parent=0 // pred_check
    _
  $region3: #{deconv2d_forward.3} parent=0 // pred_check_branch
    %10 = sbr.rel (0) target = $region5
  $region4: #{deconv2d_forward.3} parent=0 // pred_region
    _
  $region5: #{deconv2d_forward.3} parent=0 // pred_fallthru
    _
  // Predicated region
  $region6: #{deconv2d_forward.3} parent=0 // pred_check
    _
  $region7: #{deconv2d_forward.3} parent=0 // pred_check_branch
    %12 = sbr.rel (0) target = $region9
  $region8: #{deconv2d_forward.3} parent=0 // pred_region
    _
  $region9: #{deconv2d_forward.3} parent=0 // pred_fallthru
    _
  // Predicated region
  $region10: #{deconv2d_forward.3} parent=0 // pred_check
    _
  $region11: #{deconv2d_forward.3} parent=0 // pred_check_branch
    %14 = sbr.rel (0) target = $region13
  $region12: #{deconv2d_forward.3} parent=0 // pred_region
    _
  $region13: #{deconv2d_forward.3} parent=0 // pred_fallthru
    _
  // Predicated region
  $region14: #{deconv2d_forward.3} parent=0 // pred_check
    _
  $region15: #{deconv2d_forward.3} parent=0 // pred_check_branch
    %16 = sbr.rel (0) target = $region17
  $region16: #{deconv2d_forward.3} parent=0 // pred_region
    _
  $region17: #{deconv2d_forward.3} parent=0 // pred_fallthru
    _
  %v17 = vld [vmem:[%s1] sm:$0xff]
  %v18 = vld [vmem:[%s1 + $0x8] sm:$0xff]
  %v19 = vld [vmem:[%s1 + $0x10] sm:$0xff]
  %v20 = vld [vmem:[%s1 + $0x18] sm:$0xff]
  %v21 = vld [vmem:[%s0] sm:$0xff]
  %v22 = vld [vmem:[%s0 + $0x8] sm:$0xff]
  %v23 = vld [vmem:[%s0 + $0x10] sm:$0xff]
  %v24 = vld [vmem:[%s0 + $0x18] sm:$0xff]
  %v25 = vld [vmem:[%s0 + $0x20] sm:$0xff]
  %v26 = vld [vmem:[%s0 + $0x28] sm:$0xff]
  %v27 = vld [vmem:[%s0 + $0x30] sm:$0xff]
  %v28 = vld [vmem:[%s0 + $0x38] sm:$0xff]
  %vm29 = vcmask 130048
  %v31 = vsel %vm29, %v17, 0
  %v34 = vsel %vm29, %v18, 0
  %v37 = vsel %vm29, %v19, 0
  %v40 = vsel %vm29, %v20, 0
  %42 = vmatprep.subr.mxu0 %v22
  %43 = vmatpush1.msra.mxu0 %v21
  %44 = vmatprep.subr.mxu0 %v26
  %45 = vmatpush1.msra.mxu0 %v25
  %46 = vmatprep.subr.mxu0 0.0
  %47 = vmatpush1.msra.mxu0 0.0
  %48 = vmatprep.subr.mxu0 0.0
  %49 = vmatpush1.msra.mxu0 0.0
  %50 = vmatprep.subr.mxu0 0.0
  %51 = vmatpush1.msra.mxu0 0.0
  %52 = vmatprep.subr.mxu0 0.0
  %53 = vmatpush1.msra.mxu0 0.0
  %54 = vmatprep.subr.mxu0 0.0
  %55 = vmatpush1.msra.mxu0 0.0
  %56 = vmatprep.subr.mxu0 0.0
  %57 = vmatpush1.msra.mxu0 0.0
  %58 = vmatprep.subr.mxu0 0.0
  %59 = vmatpush1.msra.mxu0 0.0
  %60 = vmatprep.subr.mxu0 0.0
  %61 = vmatpush1.msra.mxu0 0.0
  %62 = vmatprep.subr.mxu0 0.0
  %63 = vmatpush1.msra.mxu0 0.0
  %64 = vmatprep.subr.mxu0 0.0
  %65 = vmatpush1.msra.mxu0 0.0
  %66 = vmatprep.subr.mxu0 0.0
  %67 = vmatpush1.msra.mxu0 0.0
  %68 = vmatprep.subr.mxu0 0.0
  %69 = vmatpush1.msra.mxu0 0.0
  %70 = vmatprep.subr.mxu0 0.0
  %71 = vmatpush1.msra.mxu0 0.0
  %72 = vmatprep.subr.mxu0 0.0
  %73 = vmatpush1.msra.mxu0 0.0
  %74 = vmatprep.subr.mxu0 0.0
  %75 = vmatpush1.msra.mxu0 0.0
  %76 = vmatprep.subr.mxu0 0.0
  %77 = vmatpush1.msra.mxu0 0.0
  %78 = vmatprep.subr.mxu0 0.0
  %79 = vmatpush1.msra.mxu0 0.0
  %80 = vmatprep.subr.mxu0 0.0
  %81 = vmatpush1.msra.mxu0 0.0
  %82 = vmatprep.subr.mxu0 0.0
  %83 = vmatpush1.msra.mxu0 0.0
  %84 = vmatprep.subr.mxu0 0.0
  %85 = vmatpush1.msra.mxu0 0.0
  %86 = vmatprep.subr.mxu0 0.0
  %87 = vmatpush1.msra.mxu0 0.0
  %88 = vmatprep.subr.mxu0 0.0
  %89 = vmatpush1.msra.mxu0 0.0
  %90 = vmatprep.subr.mxu0 0.0
  %91 = vmatpush1.msra.mxu0 0.0
  %92 = vmatprep.subr.mxu0 0.0
  %93 = vmatpush1.msra.mxu0 0.0
  %94 = vmatprep.subr.mxu0 0.0
  %95 = vmatpush1.msra.mxu0 0.0
  %96 = vmatprep.subr.mxu0 0.0
  %97 = vmatpush1.msra.mxu0 0.0
  %98 = vmatprep.subr.mxu0 0.0
  %99 = vmatpush1.msra.mxu0 0.0
  %100 = vmatprep.subr.mxu0 0.0
  %101 = vmatpush1.msra.mxu0 0.0
  %102 = vmatprep.subr.mxu0 0.0
  %103 = vmatpush1.msra.mxu0 0.0
  %104 = vmatprep.subr.mxu0 0.0
  %105 = vmatpush1.msra.mxu0 0.0
  %106 = vmatprep.mubr.f32.mxu0 0.0
  %107 = vmatmul.mubr.f32.gmra.mrb[0].mxu0 %v31
  %v108 = vpop.f32.mrb[0].mxu0
  %v109 = vadd.f32 0.0, %v108
  %v110 = vpop.f32.mrb[0].mxu0
  %v111 = vadd.f32 0.0, %v110
  %112 = vmatprep.mubr.f32.mxu0 0.0
  %113 = vmatmul.mubr.f32.gmra.mrb[0].mxu0 %v34
  %v114 = vpop.f32.mrb[0].mxu0
  %v115 = vadd.f32 0.0, %v114
  %v116 = vpop.f32.mrb[0].mxu0
  %v117 = vadd.f32 0.0, %v116
  %118 = vmatprep.mubr.f32.mxu0 0.0
  %119 = vmatmul.mubr.f32.gmra.mrb[0].mxu0 %v37
  %v120 = vpop.f32.mrb[0].mxu0
  %v121 = vadd.f32 0.0, %v120
  %v122 = vpop.f32.mrb[0].mxu0
  %v123 = vadd.f32 0.0, %v122
  %124 = vmatprep.mubr.f32.mxu0 0.0
  %125 = vmatmul.mubr.f32.gmra.mrb[0].mxu0 %v40
  %v126 = vpop.f32.mrb[0].mxu0
  %v127 = vadd.f32 0.0, %v126
  %v128 = vpop.f32.mrb[0].mxu0
  %v129 = vadd.f32 0.0, %v128
  %130 = vdwg.mxu0
  %131 = vmatprep.subr.mxu0 %v24
  %132 = vmatpush1.msra.mxu0 %v23
  %133 = vmatprep.subr.mxu0 %v28
  %134 = vmatpush1.msra.mxu0 %v27
  %135 = vmatprep.subr.mxu0 0.0
  %136 = vmatpush1.msra.mxu0 0.0
  %137 = vmatprep.subr.mxu0 0.0
  %138 = vmatpush1.msra.mxu0 0.0
  %139 = vmatprep.subr.mxu0 0.0
  %140 = vmatpush1.msra.mxu0 0.0
  %141 = vmatprep.subr.mxu0 0.0
  %142 = vmatpush1.msra.mxu0 0.0
  %143 = vmatprep.subr.mxu0 0.0
  %144 = vmatpush1.msra.mxu0 0.0
  %145 = vmatprep.subr.mxu0 0.0
  %146 = vmatpush1.msra.mxu0 0.0
  %147 = vmatprep.subr.mxu0 0.0
  %148 = vmatpush1.msra.mxu0 0.0
  %149 = vmatprep.subr.mxu0 0.0
  %150 = vmatpush1.msra.mxu0 0.0
  %151 = vmatprep.subr.mxu0 0.0
  %152 = vmatpush1.msra.mxu0 0.0
  %153 = vmatprep.subr.mxu0 0.0
  %154 = vmatpush1.msra.mxu0 0.0
  %155 = vmatprep.subr.mxu0 0.0
  %156 = vmatpush1.msra.mxu0 0.0
  %157 = vmatprep.subr.mxu0 0.0
  %158 = vmatpush1.msra.mxu0 0.0
  %159 = vmatprep.subr.mxu0 0.0
  %160 = vmatpush1.msra.mxu0 0.0
  %161 = vmatprep.subr.mxu0 0.0
  %162 = vmatpush1.msra.mxu0 0.0
  %163 = vmatprep.subr.mxu0 0.0
  %164 = vmatpush1.msra.mxu0 0.0
  %165 = vmatprep.subr.mxu0 0.0
  %166 = vmatpush1.msra.mxu0 0.0
  %167 = vmatprep.subr.mxu0 0.0
  %168 = vmatpush1.msra.mxu0 0.0
  %169 = vmatprep.subr.mxu0 0.0
  %170 = vmatpush1.msra.mxu0 0.0
  %171 = vmatprep.subr.mxu0 0.0
  %172 = vmatpush1.msra.mxu0 0.0
  %173 = vmatprep.subr.mxu0 0.0
  %174 = vmatpush1.msra.mxu0 0.0
  %175 = vmatprep.subr.mxu0 0.0
  %176 = vmatpush1.msra.mxu0 0.0
  %177 = vmatprep.subr.mxu0 0.0
  %178 = vmatpush1.msra.mxu0 0.0
  %179 = vmatprep.subr.mxu0 0.0
  %180 = vmatpush1.msra.mxu0 0.0
  %181 = vmatprep.subr.mxu0 0.0
  %182 = vmatpush1.msra.mxu0 0.0
  %183 = vmatprep.subr.mxu0 0.0
  %184 = vmatpush1.msra.mxu0 0.0
  %185 = vmatprep.subr.mxu0 0.0
  %186 = vmatpush1.msra.mxu0 0.0
  %187 = vmatprep.subr.mxu0 0.0
  %188 = vmatpush1.msra.mxu0 0.0
  %189 = vmatprep.subr.mxu0 0.0
  %190 = vmatpush1.msra.mxu0 0.0
  %191 = vmatprep.subr.mxu0 0.0
  %192 = vmatpush1.msra.mxu0 0.0
  %193 = vmatprep.subr.mxu0 0.0
  %194 = vmatpush1.msra.mxu0 0.0
  %195 = vmatprep.mubr.f32.mxu0 0.0
  %196 = vmatmul.mubr.f32.gmra.mrb[0].mxu0 %v31
  %v197 = vpop.f32.mrb[0].mxu0
  %v198 = vadd.f32 0.0, %v197
  %v199 = vpop.f32.mrb[0].mxu0
  %v200 = vadd.f32 0.0, %v199
  %201 = vmatprep.mubr.f32.mxu0 0.0
  %202 = vmatmul.mubr.f32.gmra.mrb[0].mxu0 %v34
  %v203 = vpop.f32.mrb[0].mxu0
  %v204 = vadd.f32 0.0, %v203
  %v205 = vpop.f32.mrb[0].mxu0
  %v206 = vadd.f32 0.0, %v205
  %207 = vmatprep.mubr.f32.mxu0 0.0
  %208 = vmatmul.mubr.f32.gmra.mrb[0].mxu0 %v37
  %v209 = vpop.f32.mrb[0].mxu0
  %v210 = vadd.f32 0.0, %v209
  %v211 = vpop.f32.mrb[0].mxu0
  %v212 = vadd.f32 0.0, %v211
  %213 = vmatprep.mubr.f32.mxu0 0.0
  %214 = vmatmul.mubr.f32.gmra.mrb[0].mxu0 %v40
  %v215 = vpop.f32.mrb[0].mxu0
  %v216 = vadd.f32 0.0, %v215
  %v217 = vpop.f32.mrb[0].mxu0
  %v218 = vadd.f32 0.0, %v217
  %219 = vdwg.mxu0
  %v220 = vld [vmem:[%s2] sm:$0xff]
  %v221 = vld [vmem:[%s2 + $0x8] sm:$0xff]
  %v222 = vld [vmem:[%s2 + $0x10] sm:$0xff]
  %v223 = vld [vmem:[%s2 + $0x18] sm:$0xff]
  %225 = vset.pattern.permute.xlu0 0
  %226 = vperm.xlu0 %225, %v220
  %v227 = vpop.permute.xlu0 %226
  %230 = vset.pattern.permute.xlu0 0
  %231 = vperm.xlu0 %230, %v221
  %v232 = vpop.permute.xlu0 %231
  %235 = vset.pattern.permute.xlu0 0
  %236 = vperm.xlu0 %235, %v222
  %v237 = vpop.permute.xlu0 %236
  %240 = vset.pattern.permute.xlu0 0
  %241 = vperm.xlu0 %240, %v223
  %v242 = vpop.permute.xlu0 %241
  %v244 = vmul.f32 %v109, %v227
  %v245 = vmul.f32 %v111, %v227
  %v246 = vmul.f32 %v198, %v227
  %v247 = vmul.f32 %v200, %v227
  %v248 = vmul.f32 %v115, %v232
  %v249 = vmul.f32 %v117, %v232
  %v250 = vmul.f32 %v204, %v232
  %v251 = vmul.f32 %v206, %v232
  %v252 = vmul.f32 %v121, %v237
  %v253 = vmul.f32 %v123, %v237
  %v254 = vmul.f32 %v210, %v237
  %v255 = vmul.f32 %v212, %v237
  %v256 = vmul.f32 %v127, %v242
  %v257 = vmul.f32 %v129, %v242
  %v258 = vmul.f32 %v216, %v242
  %v259 = vmul.f32 %v218, %v242
  %v260 = vld [vmem:[%s3] sm:$0xff]
  %v261 = vld [vmem:[%s3 + $0x8] sm:$0xff]
  %v262 = vld [vmem:[%s3 + $0x10] sm:$0xff]
  %v263 = vld [vmem:[%s3 + $0x18] sm:$0xff]
  %265 = vset.pattern.permute.xlu0 0
  %266 = vperm.xlu0 %265, %v260
  %v267 = vpop.permute.xlu0 %266
  %270 = vset.pattern.permute.xlu0 0
  %271 = vperm.xlu0 %270, %v261
  %v272 = vpop.permute.xlu0 %271
  %275 = vset.pattern.permute.xlu0 0
  %276 = vperm.xlu0 %275, %v262
  %v277 = vpop.permute.xlu0 %276
  %280 = vset.pattern.permute.xlu0 0
  %281 = vperm.xlu0 %280, %v263
  %v282 = vpop.permute.xlu0 %281
  %v284 = vadd.f32 %v244, %v267
  %v285 = vadd.f32 %v245, %v267
  %v286 = vadd.f32 %v246, %v267
  %v287 = vadd.f32 %v247, %v267
  %v288 = vadd.f32 %v248, %v272
  %v289 = vadd.f32 %v249, %v272
  %v290 = vadd.f32 %v250, %v272
  %v291 = vadd.f32 %v251, %v272
  %v292 = vadd.f32 %v252, %v277
  %v293 = vadd.f32 %v253, %v277
  %v294 = vadd.f32 %v254, %v277
  %v295 = vadd.f32 %v255, %v277
  %v296 = vadd.f32 %v256, %v282
  %v297 = vadd.f32 %v257, %v282
  %v298 = vadd.f32 %v258, %v282
  %v299 = vadd.f32 %v259, %v282
  %v300 = vmax.f32 %v284, 0.0
  %v301 = vmax.f32 %v285, 0.0
  %v302 = vmax.f32 %v286, 0.0
  %v303 = vmax.f32 %v287, 0.0
  %v304 = vmax.f32 %v288, 0.0
  %v305 = vmax.f32 %v289, 0.0
  %v306 = vmax.f32 %v290, 0.0
  %v307 = vmax.f32 %v291, 0.0
  %v308 = vmax.f32 %v292, 0.0
  %v309 = vmax.f32 %v293, 0.0
  %v310 = vmax.f32 %v294, 0.0
  %v311 = vmax.f32 %v295, 0.0
  %v312 = vmax.f32 %v296, 0.0
  %v313 = vmax.f32 %v297, 0.0
  %v314 = vmax.f32 %v298, 0.0
  %v315 = vmax.f32 %v299, 0.0
  %316 = vst [vmem:[%s4] sm:$0xff] %v300
  %317 = vst [vmem:[%s4 + $0x8] sm:$0xff] %v301
  %318 = vst [vmem:[%s4 + $0x10] sm:$0xff] %v302
  %319 = vst [vmem:[%s4 + $0x18] sm:$0xff] %v303
  %320 = vst [vmem:[%s4 + $0x20] sm:$0xff] %v304
  %321 = vst [vmem:[%s4 + $0x28] sm:$0xff] %v305
  %322 = vst [vmem:[%s4 + $0x30] sm:$0xff] %v306
  %323 = vst [vmem:[%s4 + $0x38] sm:$0xff] %v307
  %324 = vst [vmem:[%s4 + $0x40] sm:$0xff] %v308
  %325 = vst [vmem:[%s4 + $0x48] sm:$0xff] %v309
  %326 = vst [vmem:[%s4 + $0x50] sm:$0xff] %v310
  %327 = vst [vmem:[%s4 + $0x58] sm:$0xff] %v311
  %328 = vst [vmem:[%s4 + $0x60] sm:$0xff] %v312
  %329 = vst [vmem:[%s4 + $0x68] sm:$0xff] %v313
  %330 = vst [vmem:[%s4 + $0x70] sm:$0xff] %v314
  %331 = vst [vmem:[%s4 + $0x78] sm:$0xff] %v315
  // Predicated region
  $region18: #{deconv2d_forward.3} parent=0 // pred_check
    _
  $region19: #{deconv2d_forward.3} parent=0 // pred_check_branch
    %333 = sbr.rel (0) target = $region21
  $region20: #{deconv2d_forward.3} parent=0 // pred_region
    _
  $region21: #{deconv2d_forward.3} parent=0 // pred_fallthru
    _
  // Predicated region
  $region22: #{deconv2d_forward.3} parent=0 // pred_check
    _
  $region23: #{deconv2d_forward.3} parent=0 // pred_check_branch
    %335 = sbr.rel (0) target = $region25
  $region24: #{deconv2d_forward.3} parent=0 // pred_region
    _
  $region25: #{deconv2d_forward.3} parent=0 // pred_fallthru
    _

// kernel: deconv2d_forward.2
$region0: #{deconv2d_forward.2}
  #allocation0 [shape = 'u32[]', space=smem, size = 0x4, offset = 0x4, fixed_abs, tag = 'smem constant byte address 0x4 - core index']
  #allocation1 [shape = 'u32[144,128]{1,0:T(1,128)}', space=vmem, size = 0x12000, scoped, tag = 'internal scratch']
  %s0 = inlined_call_operand.vmem [shape: f32[16,512], index: 0, kind: input, shape index: {}]
  %s1 = inlined_call_operand.vmem [shape: f32[32,16], index: 1, kind: input, shape index: {}]
  %s2 = inlined_call_operand.vmem [shape: f32[32,1], index: 2, kind: output, shape index: {0}]
  %s3 = inlined_call_operand.vmem [shape: f32[32,1], index: 3, kind: output, shape index: {1}]
  %4 = xla_tuple %s2, %s3
  %s5 = sld [smem:[#allocation0]]
  $region26: #{deconv2d_forward.2} parent=0
    _
  %s7 = ssub.s32 1, %s5
  %s8 = scalar_select 0, %s7, %s5
  // Predicated region
  $region2: #{deconv2d_forward.2} parent=0 // pred_check
    _
  $region3: #{deconv2d_forward.2} parent=0 // pred_check_branch
    %10 = sbr.rel (0) target = $region5
  $region4: #{deconv2d_forward.2} parent=0 // pred_region
    _
  $region5: #{deconv2d_forward.2} parent=0 // pred_fallthru
    _
  // Predicated region
  $region6: #{deconv2d_forward.2} parent=0 // pred_check
    _
  $region7: #{deconv2d_forward.2} parent=0 // pred_check_branch
    %12 = sbr.rel (0) target = $region9
  $region8: #{deconv2d_forward.2} parent=0 // pred_region
    _
  $region9: #{deconv2d_forward.2} parent=0 // pred_fallthru
    _
  %v13 = vld [vmem:[%s1] sm:$0xff]
  %v14 = vld [vmem:[%s1 + $0x8] sm:$0xff]
  %v15 = vld [vmem:[%s1 + $0x10] sm:$0xff]
  %v16 = vld [vmem:[%s1 + $0x18] sm:$0xff]
  %v17 = vld [vmem:[%s0] sm:$0xff]
  %v18 = vld [vmem:[%s0 + $0x8] sm:$0xff]
  %v19 = vld [vmem:[%s0 + $0x10] sm:$0xff]
  %v20 = vld [vmem:[%s0 + $0x18] sm:$0xff]
  %v21 = vld [vmem:[%s0 + $0x20] sm:$0xff]
  %v22 = vld [vmem:[%s0 + $0x28] sm:$0xff]
  %v23 = vld [vmem:[%s0 + $0x30] sm:$0xff]
  %v24 = vld [vmem:[%s0 + $0x38] sm:$0xff]
  %vm25 = vcmask 130048
  %v27 = vsel %vm25, %v13, 0
  %v30 = vsel %vm25, %v14, 0
  %v33 = vsel %vm25, %v15, 0
  %v36 = vsel %vm25, %v16, 0
  %38 = vmatprep.subr.mxu0 %v18
  %39 = vmatpush1.msra.mxu0 %v17
  %40 = vmatprep.subr.mxu0 %v22
  %41 = vmatpush1.msra.mxu0 %v21
  %42 = vmatprep.subr.mxu0 0.0
  %43 = vmatpush1.msra.mxu0 0.0
  %44 = vmatprep.subr.mxu0 0.0
  %45 = vmatpush1.msra.mxu0 0.0
  %46 = vmatprep.subr.mxu0 0.0
  %47 = vmatpush1.msra.mxu0 0.0
  %48 = vmatprep.subr.mxu0 0.0
  %49 = vmatpush1.msra.mxu0 0.0
  %50 = vmatprep.subr.mxu0 0.0
  %51 = vmatpush1.msra.mxu0 0.0
  %52 = vmatprep.subr.mxu0 0.0
  %53 = vmatpush1.msra.mxu0 0.0
  %54 = vmatprep.subr.mxu0 0.0
  %55 = vmatpush1.msra.mxu0 0.0
  %56 = vmatprep.subr.mxu0 0.0
  %57 = vmatpush1.msra.mxu0 0.0
  %58 = vmatprep.subr.mxu0 0.0
  %59 = vmatpush1.msra.mxu0 0.0
  %60 = vmatprep.subr.mxu0 0.0
  %61 = vmatpush1.msra.mxu0 0.0
  %62 = vmatprep.subr.mxu0 0.0
  %63 = vmatpush1.msra.mxu0 0.0
  %64 = vmatprep.subr.mxu0 0.0
  %65 = vmatpush1.msra.mxu0 0.0
  %66 = vmatprep.subr.mxu0 0.0
  %67 = vmatpush1.msra.mxu0 0.0
  %68 = vmatprep.subr.mxu0 0.0
  %69 = vmatpush1.msra.mxu0 0.0
  %70 = vmatprep.subr.mxu0 0.0
  %71 = vmatpush1.msra.mxu0 0.0
  %72 = vmatprep.subr.mxu0 0.0
  %73 = vmatpush1.msra.mxu0 0.0
  %74 = vmatprep.subr.mxu0 0.0
  %75 = vmatpush1.msra.mxu0 0.0
  %76 = vmatprep.subr.mxu0 0.0
  %77 = vmatpush1.msra.mxu0 0.0
  %78 = vmatprep.subr.mxu0 0.0
  %79 = vmatpush1.msra.mxu0 0.0
  %80 = vmatprep.subr.mxu0 0.0
  %81 = vmatpush1.msra.mxu0 0.0
  %82 = vmatprep.subr.mxu0 0.0
  %83 = vmatpush1.msra.mxu0 0.0
  %84 = vmatprep.subr.mxu0 0.0
  %85 = vmatpush1.msra.mxu0 0.0
  %86 = vmatprep.subr.mxu0 0.0
  %87 = vmatpush1.msra.mxu0 0.0
  %88 = vmatprep.subr.mxu0 0.0
  %89 = vmatpush1.msra.mxu0 0.0
  %90 = vmatprep.subr.mxu0 0.0
  %91 = vmatpush1.msra.mxu0 0.0
  %92 = vmatprep.subr.mxu0 0.0
  %93 = vmatpush1.msra.mxu0 0.0
  %94 = vmatprep.subr.mxu0 0.0
  %95 = vmatpush1.msra.mxu0 0.0
  %96 = vmatprep.subr.mxu0 0.0
  %97 = vmatpush1.msra.mxu0 0.0
  %98 = vmatprep.subr.mxu0 0.0
  %99 = vmatpush1.msra.mxu0 0.0
  %100 = vmatprep.subr.mxu0 0.0
  %101 = vmatpush1.msra.mxu0 0.0
  %102 = vmatprep.mubr.f32.mxu0 0.0
  %103 = vmatmul.mubr.f32.gmra.mrb[0].mxu0 %v27
  %v104 = vpop.f32.mrb[0].mxu0
  %v105 = vadd.f32 0.0, %v104
  %v106 = vpop.f32.mrb[0].mxu0
  %v107 = vadd.f32 0.0, %v106
  %108 = vmatprep.mubr.f32.mxu0 0.0
  %109 = vmatmul.mubr.f32.gmra.mrb[0].mxu0 %v30
  %v110 = vpop.f32.mrb[0].mxu0
  %v111 = vadd.f32 0.0, %v110
  %v112 = vpop.f32.mrb[0].mxu0
  %v113 = vadd.f32 0.0, %v112
  %114 = vmatprep.mubr.f32.mxu0 0.0
  %115 = vmatmul.mubr.f32.gmra.mrb[0].mxu0 %v33
  %v116 = vpop.f32.mrb[0].mxu0
  %v117 = vadd.f32 0.0, %v116
  %v118 = vpop.f32.mrb[0].mxu0
  %v119 = vadd.f32 0.0, %v118
  %120 = vmatprep.mubr.f32.mxu0 0.0
  %121 = vmatmul.mubr.f32.gmra.mrb[0].mxu0 %v36
  %v122 = vpop.f32.mrb[0].mxu0
  %v123 = vadd.f32 0.0, %v122
  %v124 = vpop.f32.mrb[0].mxu0
  %v125 = vadd.f32 0.0, %v124
  %126 = vdwg.mxu0
  %127 = vmatprep.subr.mxu0 %v20
  %128 = vmatpush1.msra.mxu0 %v19
  %129 = vmatprep.subr.mxu0 %v24
  %130 = vmatpush1.msra.mxu0 %v23
  %131 = vmatprep.subr.mxu0 0.0
  %132 = vmatpush1.msra.mxu0 0.0
  %133 = vmatprep.subr.mxu0 0.0
  %134 = vmatpush1.msra.mxu0 0.0
  %135 = vmatprep.subr.mxu0 0.0
  %136 = vmatpush1.msra.mxu0 0.0
  %137 = vmatprep.subr.mxu0 0.0
  %138 = vmatpush1.msra.mxu0 0.0
  %139 = vmatprep.subr.mxu0 0.0
  %140 = vmatpush1.msra.mxu0 0.0
  %141 = vmatprep.subr.mxu0 0.0
  %142 = vmatpush1.msra.mxu0 0.0
  %143 = vmatprep.subr.mxu0 0.0
  %144 = vmatpush1.msra.mxu0 0.0
  %145 = vmatprep.subr.mxu0 0.0
  %146 = vmatpush1.msra.mxu0 0.0
  %147 = vmatprep.subr.mxu0 0.0
  %148 = vmatpush1.msra.mxu0 0.0
  %149 = vmatprep.subr.mxu0 0.0
  %150 = vmatpush1.msra.mxu0 0.0
  %151 = vmatprep.subr.mxu0 0.0
  %152 = vmatpush1.msra.mxu0 0.0
  %153 = vmatprep.subr.mxu0 0.0
  %154 = vmatpush1.msra.mxu0 0.0
  %155 = vmatprep.subr.mxu0 0.0
  %156 = vmatpush1.msra.mxu0 0.0
  %157 = vmatprep.subr.mxu0 0.0
  %158 = vmatpush1.msra.mxu0 0.0
  %159 = vmatprep.subr.mxu0 0.0
  %160 = vmatpush1.msra.mxu0 0.0
  %161 = vmatprep.subr.mxu0 0.0
  %162 = vmatpush1.msra.mxu0 0.0
  %163 = vmatprep.subr.mxu0 0.0
  %164 = vmatpush1.msra.mxu0 0.0
  %165 = vmatprep.subr.mxu0 0.0
  %166 = vmatpush1.msra.mxu0 0.0
  %167 = vmatprep.subr.mxu0 0.0
  %168 = vmatpush1.msra.mxu0 0.0
  %169 = vmatprep.subr.mxu0 0.0
  %170 = vmatpush1.msra.mxu0 0.0
  %171 = vmatprep.subr.mxu0 0.0
  %172 = vmatpush1.msra.mxu0 0.0
  %173 = vmatprep.subr.mxu0 0.0
  %174 = vmatpush1.msra.mxu0 0.0
  %175 = vmatprep.subr.mxu0 0.0
  %176 = vmatpush1.msra.mxu0 0.0
  %177 = vmatprep.subr.mxu0 0.0
  %178 = vmatpush1.msra.mxu0 0.0
  %179 = vmatprep.subr.mxu0 0.0
  %180 = vmatpush1.msra.mxu0 0.0
  %181 = vmatprep.subr.mxu0 0.0
  %182 = vmatpush1.msra.mxu0 0.0
  %183 = vmatprep.subr.mxu0 0.0
  %184 = vmatpush1.msra.mxu0 0.0
  %185 = vmatprep.subr.mxu0 0.0
  %186 = vmatpush1.msra.mxu0 0.0
  %187 = vmatprep.subr.mxu0 0.0
  %188 = vmatpush1.msra.mxu0 0.0
  %189 = vmatprep.subr.mxu0 0.0
  %190 = vmatpush1.msra.mxu0 0.0
  %191 = vmatprep.mubr.f32.mxu0 0.0
  %192 = vmatmul.mubr.f32.gmra.mrb[0].mxu0 %v27
  %v193 = vpop.f32.mrb[0].mxu0
  %v194 = vadd.f32 0.0, %v193
  %v195 = vpop.f32.mrb[0].mxu0
  %v196 = vadd.f32 0.0, %v195
  %197 = vmatprep.mubr.f32.mxu0 0.0
  %198 = vmatmul.mubr.f32.gmra.mrb[0].mxu0 %v30
  %v199 = vpop.f32.mrb[0].mxu0
  %v200 = vadd.f32 0.0, %v199
  %v201 = vpop.f32.mrb[0].mxu0
  %v202 = vadd.f32 0.0, %v201
  %203 = vmatprep.mubr.f32.mxu0 0.0
  %204 = vmatmul.mubr.f32.gmra.mrb[0].mxu0 %v33
  %v205 = vpop.f32.mrb[0].mxu0
  %v206 = vadd.f32 0.0, %v205
  %v207 = vpop.f32.mrb[0].mxu0
  %v208 = vadd.f32 0.0, %v207
  %209 = vmatprep.mubr.f32.mxu0 0.0
  %210 = vmatmul.mubr.f32.gmra.mrb[0].mxu0 %v36
  %v211 = vpop.f32.mrb[0].mxu0
  %v212 = vadd.f32 0.0, %v211
  %v213 = vpop.f32.mrb[0].mxu0
  %v214 = vadd.f32 0.0, %v213
  %215 = vdwg.mxu0
  %v216 = vadd.f32 %v105, %v107
  %v217 = vadd.f32 %v216, %v194
  %v218 = vadd.f32 %v217, %v196
  %219 = vadd.xlane.f32.xlu0 %v218
  %v220 = vpop.xlane.xlu0 %219
  %v221 = vadd.f32 %v111, %v113
  %v222 = vadd.f32 %v221, %v200
  %v223 = vadd.f32 %v222, %v202
  %224 = vadd.xlane.f32.xlu0 %v223
  %v225 = vpop.xlane.xlu0 %224
  %v226 = vadd.f32 %v117, %v119
  %v227 = vadd.f32 %v226, %v206
  %v228 = vadd.f32 %v227, %v208
  %229 = vadd.xlane.f32.xlu0 %v228
  %v230 = vpop.xlane.xlu0 %229
  %v231 = vadd.f32 %v123, %v125
  %v232 = vadd.f32 %v231, %v212
  %v233 = vadd.f32 %v232, %v214
  %234 = vadd.xlane.f32.xlu0 %v233
  %v235 = vpop.xlane.xlu0 %234
  %vm236 = vcmask 7168
  %237 = vst.msk [vmem:[%s2] sm:$0xff] %vm236, %v220
  %238 = vst.msk [vmem:[%s2 + $0x8] sm:$0xff] %vm236, %v225
  %239 = vst.msk [vmem:[%s2 + $0x10] sm:$0xff] %vm236, %v230
  %240 = vst.msk [vmem:[%s2 + $0x18] sm:$0xff] %vm236, %v235
  %v241 = vmul.f32 %v105, %v105
  %v242 = vmul.f32 %v107, %v107
  %v243 = vmul.f32 %v194, %v194
  %v244 = vmul.f32 %v196, %v196
  %v245 = vmul.f32 %v111, %v111
  %v246 = vmul.f32 %v113, %v113
  %v247 = vmul.f32 %v200, %v200
  %v248 = vmul.f32 %v202, %v202
  %v249 = vmul.f32 %v117, %v117
  %v250 = vmul.f32 %v119, %v119
  %v251 = vmul.f32 %v206, %v206
  %v252 = vmul.f32 %v208, %v208
  %v253 = vmul.f32 %v123, %v123
  %v254 = vmul.f32 %v125, %v125
  %v255 = vmul.f32 %v212, %v212
  %v256 = vmul.f32 %v214, %v214
  %v257 = vadd.f32 %v241, %v242
  %v258 = vadd.f32 %v257, %v243
  %v259 = vadd.f32 %v258, %v244
  %260 = vadd.xlane.f32.xlu0 %v259
  %v261 = vpop.xlane.xlu0 %260
  %v262 = vadd.f32 %v245, %v246
  %v263 = vadd.f32 %v262, %v247
  %v264 = vadd.f32 %v263, %v248
  %265 = vadd.xlane.f32.xlu0 %v264
  %v266 = vpop.xlane.xlu0 %265
  %v267 = vadd.f32 %v249, %v250
  %v268 = vadd.f32 %v267, %v251
  %v269 = vadd.f32 %v268, %v252
  %270 = vadd.xlane.f32.xlu0 %v269
  %v271 = vpop.xlane.xlu0 %270
  %v272 = vadd.f32 %v253, %v254
  %v273 = vadd.f32 %v272, %v255
  %v274 = vadd.f32 %v273, %v256
  %275 = vadd.xlane.f32.xlu0 %v274
  %v276 = vpop.xlane.xlu0 %275
  %277 = vst.msk [vmem:[%s3] sm:$0xff] %vm236, %v261
  %278 = vst.msk [vmem:[%s3 + $0x8] sm:$0xff] %vm236, %v266
  %279 = vst.msk [vmem:[%s3 + $0x10] sm:$0xff] %vm236, %v271
  %280 = vst.msk [vmem:[%s3 + $0x18] sm:$0xff] %vm236, %v276
  // Predicated region
  $region10: #{deconv2d_forward.2} parent=0 // pred_check
    _
  $region11: #{deconv2d_forward.2} parent=0 // pred_check_branch
    %282 = sbr.rel (0) target = $region13
  $region12: #{deconv2d_forward.2} parent=0 // pred_region
    _
  $region13: #{deconv2d_forward.2} parent=0 // pred_fallthru
    _
  // Predicated region
  $region14: #{deconv2d_forward.2} parent=0 // pred_check
    _
  $region15: #{deconv2d_forward.2} parent=0 // pred_check_branch
    %284 = sbr.rel (0) target = $region17
  $region16: #{deconv2d_forward.2} parent=0 // pred_region
    _
  $region17: #{deconv2d_forward.2} parent=0 // pred_fallthru
    _
  // Predicated region
  $region18: #{deconv2d_forward.2} parent=0 // pred_check
    _
  $region19: #{deconv2d_forward.2} parent=0 // pred_check_branch
    %286 = sbr.rel (0) target = $region21
  $region20: #{deconv2d_forward.2} parent=0 // pred_region
    _
  $region21: #{deconv2d_forward.2} parent=0 // pred_fallthru
    _
  // Predicated region
  $region22: #{deconv2d_forward.2} parent=0 // pred_check
    _
  $region23: #{deconv2d_forward.2} parent=0 // pred_check_branch
    %288 = sbr.rel (0) target = $region25
  $region24: #{deconv2d_forward.2} parent=0 // pred_region
    _
  $region25: #{deconv2d_forward.2} parent=0 // pred_fallthru
    _

</llo_original>
